<compile_context>
chip_gen: v7x
topology: tpu7x:2x2x1
jax: 0.10.0
libtpu: 0.0.40
codegen_flags: <defaults>
</compile_context>

<pallas_src>
import functools

import jax
import jax.numpy as jnp
from jax.experimental import pallas as pl
from jax.experimental.pallas import tpu as pltpu

GAMMA = 2.0  # deterministic "parameter" from __init__(gamma)
LANES = 128


def _focal_loss_kernel(x_ref, t_ref, out_ref, *, gamma, tile_rows, total_n, needs_mask):
    # Upcast once; math stays in f32 (required on v5e: no bf16 VPU/EUP).
    x = x_ref[...].astype(jnp.float32)
    t = t_ref[...].astype(jnp.float32)

    # BCE-with-logits, softplus form (exactly equals the PyTorch expression
    # logits - logits*target + max_val + log(exp(-max_val) + exp(-logits-max_val))):
    #   max(x, 0) - x*t + log1p(exp(-|x|))      -> 2 EUP ops instead of 3.
    loss = jnp.maximum(x, 0.0) - x * t + jnp.log1p(jnp.exp(-jnp.abs(x)))

    # Modulating factor exp(gamma * logsigmoid(z)) with z = -x * (2t - 1).
    z = -x * (2.0 * t - 1.0)
    if gamma == 2.0:
        # exp(2*logsigmoid(z)) == sigmoid(z)^2; sigmoid via one tanh (EUP) + VPU ops.
        s = 0.5 * (jnp.tanh(0.5 * z) + 1.0)
        loss = (s * s) * loss
    else:
        # General gamma: stable logsigmoid, then exp.
        invprobs = jnp.minimum(z, 0.0) - jnp.log1p(jnp.exp(-jnp.abs(z)))
        loss = jnp.exp(gamma * invprobs) * loss

    if needs_mask:
        # Zero out padded elements so they do not contribute to the sum.
        i = pl.program_id(0)
        row = jax.lax.broadcasted_iota(jnp.int32, loss.shape, 0)
        lane = jax.lax.broadcasted_iota(jnp.int32, loss.shape, 1)
        flat = (i * tile_rows + row) * LANES + lane
        loss = jnp.where(flat < total_n, loss, 0.0)

    # Partial sum for this block, kept (8,128)-aligned and lane-dense.
    # Reshape preserves (8,128) tiles; the axis-0 sum is a pure VPU add tree.
    out_ref[0] = jnp.sum(loss.reshape(tile_rows // 8, 8, LANES), axis=0)


def focal_loss(logits, target, gamma=GAMMA, max_tile_rows=1024):
    if logits.shape != target.shape:
        raise ValueError(
            f"Target size ({target.shape}) must be the same as input size ({logits.shape})"
        )
    total_n = logits.size

    # Static tiling math (Python ints).
    rows = -(-total_n // LANES)                          # ceil
    tile_rows = min(max_tile_rows, ((rows + 7) // 8) * 8)
    tile_rows = max(8, (tile_rows // 8) * 8)             # sublane-aligned
    num_blocks = -(-rows // tile_rows)                   # ceil
    padded_rows = num_blocks * tile_rows
    padded_n = padded_rows * LANES
    needs_mask = padded_n != total_n

    x_flat = logits.reshape(-1)
    t_flat = target.reshape(-1)
    if needs_mask:
        pad = padded_n - total_n
        x_flat = jnp.pad(x_flat, (0, pad))
        t_flat = jnp.pad(t_flat, (0, pad))
    x2d = x_flat.reshape(padded_rows, LANES)
    t2d = t_flat.reshape(padded_rows, LANES)

    kernel = functools.partial(
        _focal_loss_kernel,
        gamma=float(gamma),
        tile_rows=tile_rows,
        total_n=total_n,
        needs_mask=needs_mask,
    )

    partials = pl.pallas_call(
        kernel,
        out_shape=jax.ShapeDtypeStruct((num_blocks, 8, LANES), jnp.float32),
        grid=(num_blocks,),
        in_specs=[
            pl.BlockSpec((tile_rows, LANES), lambda i: (i, 0)),
            pl.BlockSpec((tile_rows, LANES), lambda i: (i, 0)),
        ],
        out_specs=pl.BlockSpec((1, 8, LANES), lambda i: (i, 0, 0)),
        compiler_params=pltpu.CompilerParams(
            dimension_semantics=("parallel",),
        ),
    )(x2d, t2d)

    # Final cross-block reduction + mean in plain JAX (tiny).
    return jnp.sum(partials) / jnp.float32(total_n)


def focal_loss_ref(logits, target, gamma=GAMMA):
    # Direct translation of the PyTorch module (spec).
    x = logits.astype(jnp.float32)
    t = target.astype(jnp.float32)
    max_val = jnp.maximum(-x, 0.0)
    loss = x - x * t + max_val + jnp.log(jnp.exp(-max_val) + jnp.exp(-x - max_val))
    invprobs = jax.nn.log_sigmoid(-x * (t * 2.0 - 1.0))
    return jnp.mean(jnp.exp(invprobs * gamma) * loss)


if __name__ == "__main__":
    key = jax.random.PRNGKey(0)
    k1, k2 = jax.random.split(key)
    # NCHW-shaped inputs, same as the PyTorch module would see.
    logits = jax.random.normal(k1, (2, 4, 16, 16), dtype=jnp.float32)
    target = (jax.random.uniform(k2, (2, 4, 16, 16)) > 0.5).astype(jnp.float32)

    out = jax.block_until_ready(focal_loss(logits, target))
    ref = focal_loss_ref(logits, target)
    assert jnp.allclose(out, ref, rtol=1e-5, atol=1e-5), (out, ref)
    print("KERNEL_OK")
</pallas_src>

<mosaic_0001>
module attributes {stable_mosaic.version = 11 : i64} {
  func.func @_focal_loss_kernel(%arg0: i32, %arg1: memref<16x128xf32, #tpu.memory_space<vmem>>, %arg2: memref<16x128xf32, #tpu.memory_space<vmem>>, %arg3: memref<1x8x128xf32, #tpu.memory_space<vmem>>) attributes {dimension_semantics = [#tpu.dimension_semantics<parallel>], iteration_bounds = array<i64: 1>, scalar_prefetch = 0 : i64, scratch_operands = 0 : i64, tpu.core_type = #tpu.core_type<tc>, window_params = [{transform_indices = @transform_0, window_bounds = array<i64: 16, 128>}, {transform_indices = @transform_1, window_bounds = array<i64: 16, 128>}, {transform_indices = @transform_2, window_bounds = array<i64: 1, 8, 128>}]} {
    %c0 = arith.constant 0 : index
    %c0_0 = arith.constant 0 : index
    %0 = vector.load %arg1[%c0, %c0_0] : memref<16x128xf32, #tpu.memory_space<vmem>>, vector<16x128xf32>
    %c0_1 = arith.constant 0 : index
    %c0_2 = arith.constant 0 : index
    %1 = vector.load %arg2[%c0_1, %c0_2] : memref<16x128xf32, #tpu.memory_space<vmem>>, vector<16x128xf32>
    %cst = arith.constant 0.000000e+00 : f32
    %2 = vector.broadcast %cst : f32 to vector<16x128xf32>
    %3 = arith.maximumf %0, %2 : vector<16x128xf32>
    %4 = arith.mulf %0, %1 : vector<16x128xf32>
    %5 = arith.subf %3, %4 : vector<16x128xf32>
    %6 = math.absf %0 : vector<16x128xf32>
    %cst_3 = arith.constant 0.000000e+00 : f32
    %7 = vector.broadcast %cst_3 : f32 to vector<16x128xf32>
    %8 = arith.subf %7, %6 : vector<16x128xf32>
    %9 = math.exp %8 : vector<16x128xf32>
    %10 = math.log1p %9 : vector<16x128xf32>
    %11 = arith.addf %5, %10 : vector<16x128xf32>
    %cst_4 = arith.constant 0.000000e+00 : f32
    %12 = vector.broadcast %cst_4 : f32 to vector<16x128xf32>
    %13 = arith.subf %12, %0 : vector<16x128xf32>
    %cst_5 = arith.constant 2.000000e+00 : f32
    %14 = vector.broadcast %cst_5 : f32 to vector<16x128xf32>
    %15 = arith.mulf %14, %1 : vector<16x128xf32>
    %cst_6 = arith.constant 1.000000e+00 : f32
    %16 = vector.broadcast %cst_6 : f32 to vector<16x128xf32>
    %17 = arith.subf %15, %16 : vector<16x128xf32>
    %18 = arith.mulf %13, %17 : vector<16x128xf32>
    %cst_7 = arith.constant 5.000000e-01 : f32
    %19 = vector.broadcast %cst_7 : f32 to vector<16x128xf32>
    %20 = arith.mulf %19, %18 : vector<16x128xf32>
    %21 = math.tanh %20 : vector<16x128xf32>
    %cst_8 = arith.constant 1.000000e+00 : f32
    %22 = vector.broadcast %cst_8 : f32 to vector<16x128xf32>
    %23 = arith.addf %21, %22 : vector<16x128xf32>
    %cst_9 = arith.constant 5.000000e-01 : f32
    %24 = vector.broadcast %cst_9 : f32 to vector<16x128xf32>
    %25 = arith.mulf %24, %23 : vector<16x128xf32>
    %26 = arith.mulf %25, %25 : vector<16x128xf32>
    %27 = arith.mulf %26, %11 : vector<16x128xf32>
    %28 = vector.shape_cast %27 : vector<16x128xf32> to vector<2x8x128xf32>
    %cst_10 = arith.constant dense<0.000000e+00> : vector<8x128xf32>
    %29 = vector.multi_reduction <add>, %28, %cst_10 [0] : vector<2x8x128xf32> to vector<8x128xf32>
    %c0_11 = arith.constant 0 : index
    %c0_12 = arith.constant 0 : index
    %c0_13 = arith.constant 0 : index
    %30 = vector.load %arg3[%c0_11, %c0_12, %c0_13] : memref<1x8x128xf32, #tpu.memory_space<vmem>>, vector<1x8x128xf32>
    %31 = vector.shape_cast %30 : vector<1x8x128xf32> to vector<8x128xf32>
    %32 = vector.shape_cast %29 : vector<8x128xf32> to vector<1x8x128xf32>
    tpu.vector_store %arg3[%c0_11, %c0_12, %c0_13], %32 {strides = array<i32>} : memref<1x8x128xf32, #tpu.memory_space<vmem>>, vector<1x8x128xf32>,
    return
  }
  func.func @transform_0(%arg0: i32) -> (i32, i32) {
    %c0_i32 = arith.constant 0 : i32
    %c0_i32_0 = arith.constant 0 : i32
    return %arg0, %c0_i32 : i32, i32
  }
  func.func @transform_1(%arg0: i32) -> (i32, i32) {
    %c0_i32 = arith.constant 0 : i32
    %c0_i32_0 = arith.constant 0 : i32
    return %arg0, %c0_i32 : i32, i32
  }
  func.func @transform_2(%arg0: i32) -> (i32, i32, i32) {
    %c0_i32 = arith.constant 0 : i32
    %c0_i32_0 = arith.constant 0 : i32
    %c0_i32_1 = arith.constant 0 : i32
    return %arg0, %c0_i32, %c0_i32_0 : i32, i32, i32
  }
}

</mosaic_0001>

<llo_original>
// kernel: tpu_custom_call.1
$region0: #{tpu_custom_call.1}
  #allocation0 [shape = 'u32[]', space=smem, size = 0x4, offset = 0x4, fixed_abs, tag = 'smem constant byte address 0x4 - core index']
  #allocation1 [shape = 'u32[144,128]{1,0:T(1,128)}', space=vmem, size = 0x12000, scoped, tag = 'internal scratch']
  %s0 = inlined_call_operand.hbm [shape: f32[16,128], index: 0, kind: input, shape index: {}]
  %s1 = inlined_call_operand.hbm [shape: f32[16,128], index: 1, kind: input, shape index: {}]
  %s2 = inlined_call_operand.hbm [shape: f32[1,8,128], index: 2, kind: output, shape index: {}]
  %s3 = sld [smem:[#allocation0]]
  $region26: #{tpu_custom_call.1} parent=0
    _
  %s5 = ssub.s32 1, %s3
  %s6 = scalar_select 0, %s5, %s3
  $region1: #{tpu_custom_call.1} parent=0
    #allocation2 [shape = 'u8[8192]{0}', space=vmem, size = 0x2000, scoped, tag = 'input window, operand 0, single buffered']
    #allocation3 [shape = 's32[1]{0}', space=sflag, size = 0x4, scoped, tag = 'scoped memory for tpu_custom_call.1']
    #allocation4 [shape = 's32[1]{0}', space=sflag, size = 0x4, scoped, tag = 'scoped memory for tpu_custom_call.1']
    #allocation5 [shape = 'u8[8192]{0}', space=vmem, size = 0x2000, scoped, tag = 'input window, operand 1, single buffered']
    #allocation6 [shape = 's32[1]{0}', space=sflag, size = 0x4, scoped, tag = 'scoped memory for tpu_custom_call.1']
    #allocation7 [shape = 'u8[4096]{0}', space=vmem, size = 0x1000, scoped, tag = 'output window, operand 0, single buffered']
    %7 = vsyncpa [#allocation3], 0
    %8 = vsyncpa [#allocation6], 0
    %9 = vsyncpa [#allocation4], 0
    // Predicated region
    $region2: #{tpu_custom_call.1} parent=1 // pred_check
      _
    $region3: #{tpu_custom_call.1} parent=1 // pred_check_branch
      %11 = sbr.rel (0) target = $region5
    $region4: #{tpu_custom_call.1} parent=1 // pred_region
      %s13 = ssub.s32 256, 256
      %14 = vsyncadd [#allocation3], %s13
      %s15 = sshll.u32 [#allocation2], 4
      %s16 = int_to_ptr.vmem [resolvable:$true] %s15
      %21 = dma.hbm_to_vmem [thread:$0]  %s0, 256, %s16, [#allocation3], 128, 128, 8
    $region5: #{tpu_custom_call.1} parent=1 // pred_fallthru
      _
    // Predicated region
    $region6: #{tpu_custom_call.1} parent=1 // pred_check
      _
    $region7: #{tpu_custom_call.1} parent=1 // pred_check_branch
      %23 = sbr.rel (0) target = $region9
    $region8: #{tpu_custom_call.1} parent=1 // pred_region
      %s25 = ssub.s32 256, 256
      %26 = vsyncadd [#allocation6], %s25
      %s27 = sshll.u32 [#allocation5], 4
      %s28 = int_to_ptr.vmem [resolvable:$true] %s27
      %33 = dma.hbm_to_vmem [thread:$0]  %s1, 256, %s28, [#allocation6], 128, 128, 8
    $region9: #{tpu_custom_call.1} parent=1 // pred_fallthru
      _
    // Predicated region
    $region10: #{tpu_custom_call.1} parent=1 // pred_check
      _
    $region11: #{tpu_custom_call.1} parent=1 // pred_check_branch
      %35 = sbr.rel (0) target = $region13
    $region12: #{tpu_custom_call.1} parent=1 // pred_region
      %36 = dma.done [#allocation3], 256
    $region13: #{tpu_custom_call.1} parent=1 // pred_fallthru
      _
    // Predicated region
    $region14: #{tpu_custom_call.1} parent=1 // pred_check
      _
    $region15: #{tpu_custom_call.1} parent=1 // pred_check_branch
      %38 = sbr.rel (0) target = $region17
    $region16: #{tpu_custom_call.1} parent=1 // pred_region
      %39 = dma.done [#allocation6], 256
    $region17: #{tpu_custom_call.1} parent=1 // pred_fallthru
      _
    %v40 = vld [vmem:[#allocation2] sm:$0xff]
    %v41 = vld [vmem:[#allocation2 + $0x8] sm:$0xff]
    %v42 = vld [vmem:[#allocation5] sm:$0xff]
    %v43 = vld [vmem:[#allocation5 + $0x8] sm:$0xff]
    %v44 = vmax.f32 %v40, 0.0
    %v45 = vmax.f32 %v41, 0.0
    %v46 = vmul.f32 %v40, %v42
    %v47 = vmul.f32 %v41, %v43
    %v48 = vsub.f32 %v44, %v46
    %v49 = vsub.f32 %v45, %v47
    %v50 = vand.u32 2147483647, %v40
    %v51 = vand.u32 2147483647, %v41
    %v52 = vsub.f32 0.0, %v50
    %v53 = vsub.f32 0.0, %v51
    %v54 = vmul.f32 %v52, 1.442695
    %v55 = vpow.pop %v54
    %v56 = vmul.f32 %v53, 1.442695
    %v57 = vpow.pop %v56
    %v58 = vadd.f32 %v55, 1.0
    %v59 = vlog2.pop %v58
    %v60 = vmul.f32 %v59, 0.6931472
    %v61 = vmul.f32 -0.5, %v55
    %v62 = vadd.f32 %v61, 1.0
    %v63 = vmul.f32 %v62, %v55
    %v64 = vand.u32 2147483647, %v55
    %vm65 = vcmp.lt.f32.partialorder %v64, 0.0004427343
    %v66 = vsel %vm65, %v63, %v60
    %v67 = vadd.f32 %v57, 1.0
    %v68 = vlog2.pop %v67
    %v69 = vmul.f32 %v68, 0.6931472
    %v70 = vmul.f32 -0.5, %v57
    %v71 = vadd.f32 %v70, 1.0
    %v72 = vmul.f32 %v71, %v57
    %v73 = vand.u32 2147483647, %v57
    %vm74 = vcmp.lt.f32.partialorder %v73, 0.0004427343
    %v75 = vsel %vm74, %v72, %v69
    %v76 = vadd.f32 %v48, %v66
    %v77 = vadd.f32 %v49, %v75
    %v78 = vsub.f32 0.0, %v40
    %v79 = vsub.f32 0.0, %v41
    %v80 = vmul.f32 %v42, 2.0
    %v81 = vmul.f32 %v43, 2.0
    %v82 = vsub.f32 %v80, 1.0
    %v83 = vsub.f32 %v81, 1.0
    %v84 = vmul.f32 %v78, %v82
    %v85 = vmul.f32 %v79, %v83
    %v86 = vmul.f32 %v84, 0.5
    %v87 = vmul.f32 %v85, 0.5
    %v88 = vtanh.pop %v86
    %v89 = vtanh.pop %v87
    %v90 = vadd.f32 %v88, 1.0
    %v91 = vadd.f32 %v89, 1.0
    %v92 = vmul.f32 %v90, 0.5
    %v93 = vmul.f32 %v91, 0.5
    %v94 = vmul.f32 %v92, %v92
    %v95 = vmul.f32 %v93, %v93
    %v96 = vmul.f32 %v94, %v76
    %v97 = vmul.f32 %v95, %v77
    %v98 = vadd.f32 %v96, %v97
    %99 = vst [vmem:[#allocation7] sm:$0xff] %v98
    // Predicated region
    $region18: #{tpu_custom_call.1} parent=1 // pred_check
      _
    $region19: #{tpu_custom_call.1} parent=1 // pred_check_branch
      %101 = sbr.rel (0) target = $region21
    $region20: #{tpu_custom_call.1} parent=1 // pred_region
      %s103 = ssub.s32 128, 128
      %104 = vsyncadd [#allocation4], %s103
      %s106 = sshll.u32 [#allocation7], 4
      %s107 = int_to_ptr.vmem [resolvable:$true] %s106
      %109 = dma.vmem_to_hbm [thread:$0]  %s107, 128, %s2, [#allocation4]
    $region21: #{tpu_custom_call.1} parent=1 // pred_fallthru
      _
    // Predicated region
    $region22: #{tpu_custom_call.1} parent=1 // pred_check
      _
    $region23: #{tpu_custom_call.1} parent=1 // pred_check_branch
      %111 = sbr.rel (0) target = $region25
    $region24: #{tpu_custom_call.1} parent=1 // pred_region
      %112 = dma.done [#allocation4], 128
    $region25: #{tpu_custom_call.1} parent=1 // pred_fallthru
      _
    %113 = vsyncpa [#allocation3], 1
    %114 = vsyncpa [#allocation6], 1
    %115 = vsyncpa [#allocation4], 1

</llo_original>
